<compile_context>
chip_gen: v7x
topology: tpu7x:2x2x1
jax: 0.10.0
libtpu: 0.0.40
codegen_flags: <defaults>
</compile_context>

<pallas_src>
import functools

import jax
import jax.numpy as jnp
from jax.experimental import pallas as pl
from jax.experimental.pallas import tpu as pltpu


def _round_up(x: int, m: int) -> int:
    return ((x + m - 1) // m) * m


def _cdiv(a: int, b: int) -> int:
    return (a + b - 1) // b


def _linear_tanh_kernel_direct(x_ref, w_ref, b_ref, o_ref):
    """f32-output path: accumulate straight into the resident output block."""
    k = pl.program_id(2)

    @pl.when(k == 0)
    def _init():
        o_ref[...] = jnp.zeros_like(o_ref)

    # MXU matmul with f32 accumulation into the revisited output tile.
    o_ref[...] += jnp.dot(
        x_ref[...], w_ref[...], preferred_element_type=jnp.float32
    )

    @pl.when(k == pl.num_programs(2) - 1)
    def _epilogue():
        # Bias add (VPU) + tanh (EUP) once per (i, j) output tile.
        o_ref[...] = jnp.tanh(o_ref[...] + b_ref[...].astype(jnp.float32))


def _linear_tanh_kernel_scratch(x_ref, w_ref, b_ref, o_ref, acc_ref):
    """Narrow-output path: f32 scratch accumulator, downcast in epilogue."""
    k = pl.program_id(2)

    @pl.when(k == 0)
    def _init():
        acc_ref[...] = jnp.zeros_like(acc_ref)

    acc_ref[...] += jnp.dot(
        x_ref[...], w_ref[...], preferred_element_type=jnp.float32
    )

    @pl.when(k == pl.num_programs(2) - 1)
    def _epilogue():
        y = acc_ref[...] + b_ref[...].astype(jnp.float32)
        o_ref[...] = jnp.tanh(y).astype(o_ref.dtype)


@functools.partial(
    jax.jit, static_argnames=("tm", "tn", "tk", "cast_inputs_to_bf16")
)
def linear_tanh(x, weight_t, bias, *, tm=512, tn=1024, tk=1024,
                cast_inputs_to_bf16=False):
    """y = tanh(x @ weight_t + bias).

    x:        (..., K)
    weight_t: (K, N)   (PyTorch weight, pre-transposed)
    bias:     (N,)
    """
    orig_shape = x.shape
    K = orig_shape[-1]
    x2 = x.reshape(-1, K)
    M = x2.shape[0]
    Kw, N = weight_t.shape
    assert K == Kw, (K, Kw)
    assert bias.shape == (N,)

    out_dtype = x.dtype

    # --- Tile selection --------------------------------------------------
    # Legal-ize user tiles: second-to-last block dim multiple of 8, last block
    # dim multiple of 128 (the TPU (8, 128) constraint).
    tm = max(8, _round_up(int(tm), 8))
    tn = max(128, _round_up(int(tn), 128))
    tk = max(128, _round_up(int(tk), 128))

    # Small extents: a single full-extent block is always a legal block shape
    # and needs no padding at all.
    if M <= tm:
        tm = M
    if N <= tn:
        tn = N
    if K <= tk:
        tk = K

    # K is the reduction axis: undefined data in a partial edge block would
    # corrupt real outputs, so zero-pad K (and only K) when it spans several
    # k-blocks.  M / N edges need no padding: partial edge blocks only produce
    # garbage in rows / columns that are masked on the output store.
    Kp = K if K <= tk else _round_up(K, tk)
    if Kp != K:
        x2 = jnp.pad(x2, ((0, 0), (0, Kp - K)))
        weight_t = jnp.pad(weight_t, ((0, Kp - K), (0, 0)))

    grid_m = _cdiv(M, tm)
    grid_n = _cdiv(N, tn)
    grid_k = Kp // tk

    # Megacore balance (v7x: 2 TensorCores shard the "parallel" grid axes).
    # If everything collapsed into one (i, j) tile, split a tile dimension so
    # both cores get work -- split tn first (keeps tm large for W reuse, which
    # matters most on bandwidth-limited v5e), tm otherwise.
    if grid_m * grid_n < 2:
        if tn % 256 == 0:          # halved tn stays a multiple of 128
            tn //= 2
        elif tm % 16 == 0:         # halved tm stays a multiple of 8
            tm //= 2
        grid_m = _cdiv(M, tm)
        grid_n = _cdiv(N, tn)

    # Optional bf16 streaming of x / W (f32 accumulation is preserved).
    if cast_inputs_to_bf16:
        x2 = x2.astype(jnp.bfloat16)
        weight_t = weight_t.astype(jnp.bfloat16)

    bias2 = bias.reshape(1, N)

    # f32 output: accumulate directly into o_ref, no scratch needed.
    if out_dtype == jnp.float32:
        kernel = _linear_tanh_kernel_direct
        scratch_shapes = []
    else:
        kernel = _linear_tanh_kernel_scratch
        scratch_shapes = [pltpu.VMEM((tm, tn), jnp.float32)]

    cost = pl.CostEstimate(
        flops=2 * M * N * Kp,
        transcendentals=M * N,
        bytes_accessed=(
            x2.size * x2.dtype.itemsize
            + weight_t.size * weight_t.dtype.itemsize
            + bias2.size * bias2.dtype.itemsize
            + M * N * jnp.dtype(out_dtype).itemsize
        ),
    )

    out = pl.pallas_call(
        kernel,
        out_shape=jax.ShapeDtypeStruct((M, N), out_dtype),
        grid_spec=pltpu.PrefetchScalarGridSpec(
            num_scalar_prefetch=0,
            grid=(grid_m, grid_n, grid_k),
            in_specs=[
                pl.BlockSpec((tm, tk), lambda i, j, k: (i, k)),   # x tile
                pl.BlockSpec((tk, tn), lambda i, j, k: (k, j)),   # W_t tile
                pl.BlockSpec((1, tn), lambda i, j, k: (0, j)),    # bias tile
            ],
            out_specs=pl.BlockSpec((tm, tn), lambda i, j, k: (i, j)),
            scratch_shapes=scratch_shapes,
        ),
        compiler_params=pltpu.CompilerParams(
            dimension_semantics=("parallel", "parallel", "arbitrary"),
            # Large-tile headroom on every generation; stays under the 64 MiB
            # physical VMEM of v7x while exceeding the 16/32 MiB defaults.
            vmem_limit_bytes=48 * 1024 * 1024,
        ),
        cost_estimate=cost,
    )(x2, weight_t, bias2)

    return out.reshape(orig_shape[:-1] + (N,))


def _make_params(key, input_dim, output_dim, dtype=jnp.float32):
    """nn.Linear-style init; returns (W_t, b) with W_t = W_pt.T."""
    kw, kb = jax.random.split(key)
    bound = 1.0 / (input_dim ** 0.5)
    w_pt = jax.random.uniform(
        kw, (output_dim, input_dim), minval=-bound, maxval=bound, dtype=dtype
    )
    b = jax.random.uniform(
        kb, (output_dim,), minval=-bound, maxval=bound, dtype=dtype
    )
    return w_pt.T, b


if __name__ == "__main__":
    key = jax.random.PRNGKey(0)
    ks = jax.random.split(key, 4)

    def ref(x, w_t, b):
        return jnp.tanh(
            jnp.dot(x, w_t, precision=jax.lax.Precision.HIGHEST) + b
        )

    ok = True

    # --- Test 1: tiny, module-like shapes (batch=8, in=32, out=16). -------
    # Single full-extent block, no padding, grid (1, 1, 1).
    B1, IN1, OUT1 = 8, 32, 16
    x1 = jax.random.normal(ks[0], (B1, IN1), dtype=jnp.float32)
    w1_t, b1 = _make_params(ks[1], IN1, OUT1)
    out1 = linear_tanh(x1, w1_t, b1)
    jax.block_until_ready(out1)
    ok &= out1.shape == (B1, OUT1)
    ok &= bool(jnp.allclose(out1, ref(x1, w1_t, b1), atol=1e-4, rtol=1e-4))

    # --- Test 2: full 3-D grid with M/N edge blocks and K-only padding. ---
    # grid (2, 2, 3): M=150 -> 128+22 edge, N=200 -> 128+72 edge, K=300 padded
    # to 384 along the reduction axis only.
    B2, IN2, OUT2 = 150, 300, 200
    x2 = jax.random.normal(ks[2], (B2, IN2), dtype=jnp.float32)
    w2_t, b2 = _make_params(ks[3], IN2, OUT2)
    out2 = linear_tanh(x2, w2_t, b2, tm=128, tn=128, tk=128)
    jax.block_until_ready(out2)
    ok &= out2.shape == (B2, OUT2)
    ok &= bool(jnp.allclose(out2, ref(x2, w2_t, b2), atol=1e-4, rtol=1e-4))

    # --- Test 3: bf16 input streaming fast path (looser tolerance). -------
    out3 = linear_tanh(x2, w2_t, b2, cast_inputs_to_bf16=True)
    jax.block_until_ready(out3)
    ok &= out3.shape == (B2, OUT2)
    ok &= bool(jnp.allclose(out3, ref(x2, w2_t, b2), atol=3e-2, rtol=3e-2))

    assert ok, "Pallas LinearTanh mismatch vs JAX reference"
    print("KERNEL_OK")
</pallas_src>

<mosaic_0001>
module attributes {stable_mosaic.version = 11 : i64} {
  func.func @_linear_tanh_kernel_direct(%arg0: i32, %arg1: i32, %arg2: i32, %arg3: memref<8x32xf32, #tpu.memory_space<vmem>>, %arg4: memref<32x16xf32, #tpu.memory_space<vmem>>, %arg5: memref<1x16xf32, #tpu.memory_space<vmem>>, %arg6: memref<8x16xf32, #tpu.memory_space<vmem>>) attributes {dimension_semantics = [#tpu.dimension_semantics<parallel>, #tpu.dimension_semantics<parallel>, #tpu.dimension_semantics<arbitrary>], iteration_bounds = array<i64: 1, 1, 1>, scalar_prefetch = 0 : i64, scratch_operands = 0 : i64, tpu.core_type = #tpu.core_type<tc>, window_params = [{transform_indices = @transform_0, window_bounds = array<i64: 8, 32>}, {transform_indices = @transform_1, window_bounds = array<i64: 32, 16>}, {transform_indices = @transform_2, window_bounds = array<i64: 1, 16>}, {transform_indices = @transform_3, window_bounds = array<i64: 8, 16>}]} {
    %c0_i32 = arith.constant 0 : i32
    %0 = arith.cmpi eq, %arg2, %c0_i32 : i32
    %1 = arith.extui %0 : i1 to i32
    %c0_i32_0 = arith.constant 0 : i32
    %2 = arith.cmpi ne, %1, %c0_i32_0 : i32
    scf.if %2 {
      %cst_10 = arith.constant 0.000000e+00 : f32
      %12 = vector.broadcast %cst_10 : f32 to vector<8x16xf32>
      %c0_11 = arith.constant 0 : index
      %c0_12 = arith.constant 0 : index
      %13 = vector.load %arg6[%c0_11, %c0_12] : memref<8x16xf32, #tpu.memory_space<vmem>>, vector<8x16xf32>
      tpu.vector_store %arg6[%c0_11, %c0_12], %12 {strides = array<i32>} : memref<8x16xf32, #tpu.memory_space<vmem>>, vector<8x16xf32>,
    } else {
    }
    %c0 = arith.constant 0 : index
    %c0_1 = arith.constant 0 : index
    %3 = vector.load %arg6[%c0, %c0_1] : memref<8x16xf32, #tpu.memory_space<vmem>>, vector<8x16xf32>
    %c0_2 = arith.constant 0 : index
    %c0_3 = arith.constant 0 : index
    %4 = vector.load %arg3[%c0_2, %c0_3] : memref<8x32xf32, #tpu.memory_space<vmem>>, vector<8x32xf32>
    %c0_4 = arith.constant 0 : index
    %c0_5 = arith.constant 0 : index
    %5 = vector.load %arg4[%c0_4, %c0_5] : memref<32x16xf32, #tpu.memory_space<vmem>>, vector<32x16xf32>
    %cst = arith.constant dense<0.000000e+00> : vector<8x16xf32>
    %6 = tpu.matmul %4, %5, %cst {dimension_numbers = #tpu.dot_dimension_numbers<[1], [0], [0], [1], [0, 0, 1, 1], [], []>} : vector<8x32xf32>, vector<32x16xf32>, vector<8x16xf32> -> vector<8x16xf32>
    %7 = arith.addf %3, %6 : vector<8x16xf32>
    %c0_6 = arith.constant 0 : index
    %c0_7 = arith.constant 0 : index
    %8 = vector.load %arg6[%c0_6, %c0_7] : memref<8x16xf32, #tpu.memory_space<vmem>>, vector<8x16xf32>
    tpu.vector_store %arg6[%c0_6, %c0_7], %7 {strides = array<i32>} : memref<8x16xf32, #tpu.memory_space<vmem>>, vector<8x16xf32>,
    %c0_i32_8 = arith.constant 0 : i32
    %9 = arith.cmpi eq, %arg2, %c0_i32_8 : i32
    %10 = arith.extui %9 : i1 to i32
    %c0_i32_9 = arith.constant 0 : i32
    %11 = arith.cmpi ne, %10, %c0_i32_9 : i32
    scf.if %11 {
      %c0_10 = arith.constant 0 : index
      %c0_11 = arith.constant 0 : index
      %12 = vector.load %arg6[%c0_10, %c0_11] : memref<8x16xf32, #tpu.memory_space<vmem>>, vector<8x16xf32>
      %c0_12 = arith.constant 0 : index
      %c0_13 = arith.constant 0 : index
      %13 = vector.load %arg5[%c0_12, %c0_13] : memref<1x16xf32, #tpu.memory_space<vmem>>, vector<1x16xf32>
      %14 = vector.broadcast %13 : vector<1x16xf32> to vector<8x16xf32>
      %15 = arith.addf %12, %14 : vector<8x16xf32>
      %16 = math.tanh %15 : vector<8x16xf32>
      %c0_14 = arith.constant 0 : index
      %c0_15 = arith.constant 0 : index
      %17 = vector.load %arg6[%c0_14, %c0_15] : memref<8x16xf32, #tpu.memory_space<vmem>>, vector<8x16xf32>
      tpu.vector_store %arg6[%c0_14, %c0_15], %16 {strides = array<i32>} : memref<8x16xf32, #tpu.memory_space<vmem>>, vector<8x16xf32>,
    } else {
    }
    return
  }
  func.func @transform_0(%arg0: i32, %arg1: i32, %arg2: i32) -> (i32, i32) {
    %c0_i32 = arith.constant 0 : i32
    return %arg0, %arg2 : i32, i32
  }
  func.func @transform_1(%arg0: i32, %arg1: i32, %arg2: i32) -> (i32, i32) {
    %c0_i32 = arith.constant 0 : i32
    return %arg2, %arg1 : i32, i32
  }
  func.func @transform_2(%arg0: i32, %arg1: i32, %arg2: i32) -> (i32, i32) {
    %c0_i32 = arith.constant 0 : i32
    %c0_i32_0 = arith.constant 0 : i32
    return %c0_i32, %arg1 : i32, i32
  }
  func.func @transform_3(%arg0: i32, %arg1: i32, %arg2: i32) -> (i32, i32) {
    %c0_i32 = arith.constant 0 : i32
    return %arg0, %arg1 : i32, i32
  }
}

</mosaic_0001>

<llo_original>
// kernel: linear_tanh.1
$region0: #{linear_tanh.1}
  #allocation0 [shape = 'u32[]', space=smem, size = 0x4, offset = 0x4, fixed_abs, tag = 'smem constant byte address 0x4 - core index']
  #allocation1 [shape = 'u32[144,128]{1,0:T(1,128)}', space=vmem, size = 0x12000, scoped, tag = 'internal scratch']
  %s0 = inlined_call_operand.vmem [shape: f32[8,32], index: 0, kind: input, shape index: {}]
  %s1 = inlined_call_operand.vmem [shape: f32[32,16], index: 1, kind: input, shape index: {}]
  %s2 = inlined_call_operand.vmem [shape: f32[1,16], index: 2, kind: input, shape index: {}]
  %s3 = inlined_call_operand.hbm [shape: f32[8,16], index: 3, kind: output, shape index: {}]
  %s4 = sld [smem:[#allocation0]]
  $region30: #{linear_tanh.1} parent=0
    _
  %s6 = ssub.s32 1, %s4
  %s7 = scalar_select 0, %s6, %s4
  $region1: #{linear_tanh.1} parent=0
    #allocation2 [shape = 'u8[4096]{0}', space=vmem, size = 0x1000, scoped, tag = 'output window, operand 0, single buffered']
    #allocation3 [shape = 's32[1]{0}', space=sflag, size = 0x4, scoped, tag = 'scoped memory for linear_tanh.1']
    %8 = vsyncpa [#allocation3], 0
    // Predicated region
    $region2: #{linear_tanh.1} parent=1 // pred_check
      _
    $region3: #{linear_tanh.1} parent=1 // pred_check_branch
      %10 = sbr.rel (0) target = $region5
    $region4: #{linear_tanh.1} parent=1 // pred_region
      _
    $region5: #{linear_tanh.1} parent=1 // pred_fallthru
      _
    // Predicated region
    $region6: #{linear_tanh.1} parent=1 // pred_check
      _
    $region7: #{linear_tanh.1} parent=1 // pred_check_branch
      %12 = sbr.rel (0) target = $region9
    $region8: #{linear_tanh.1} parent=1 // pred_region
      _
    $region9: #{linear_tanh.1} parent=1 // pred_fallthru
      _
    // Predicated region
    $region10: #{linear_tanh.1} parent=1 // pred_check
      _
    $region11: #{linear_tanh.1} parent=1 // pred_check_branch
      %14 = sbr.rel (0) target = $region13
    $region12: #{linear_tanh.1} parent=1 // pred_region
      _
    $region13: #{linear_tanh.1} parent=1 // pred_fallthru
      _
    %p15 = scmp.eq.s32.totalorder 0, 0
    // Predicated region
    $region14: #{linear_tanh.1} parent=1 // pred_check
      %p16 = pneg %p15
    $region15: #{linear_tanh.1} parent=1 // pred_check_branch
      %18 = sbr.rel (%p16) target = $region17
    $region16: #{linear_tanh.1} parent=1 // pred_region
      %vm19 = vcmask 130048
      %20 = vst.msk [vmem:[#allocation2] sm:$0xff] %vm19, 0.0
    $region17: #{linear_tanh.1} parent=1 // pred_fallthru
      _
    %v21 = vld [vmem:[#allocation2] sm:$0xff]
    %v22 = vld [vmem:[%s0] sm:$0xff]
    %v23 = vld [vmem:[%s1] sm:$0xff]
    %v24 = vld [vmem:[%s1 + $0x8] sm:$0xff]
    %v25 = vld [vmem:[%s1 + $0x10] sm:$0xff]
    %v26 = vld [vmem:[%s1 + $0x18] sm:$0xff]
    %vm27 = vcmask 261120
    %v29 = vsel %vm27, %v22, 0
    %31 = vmatprep.subr.mxu0 0.0
    %32 = vmatpush1.msra.mxu0 %v23
    %33 = vmatprep.subr.mxu0 0.0
    %34 = vmatpush1.msra.mxu0 %v24
    %35 = vmatprep.subr.mxu0 0.0
    %36 = vmatpush1.msra.mxu0 %v25
    %37 = vmatprep.subr.mxu0 0.0
    %38 = vmatpush1.msra.mxu0 %v26
    %39 = vmatprep.subr.mxu0 0.0
    %40 = vmatpush1.msra.mxu0 0.0
    %41 = vmatprep.subr.mxu0 0.0
    %42 = vmatpush1.msra.mxu0 0.0
    %43 = vmatprep.subr.mxu0 0.0
    %44 = vmatpush1.msra.mxu0 0.0
    %45 = vmatprep.subr.mxu0 0.0
    %46 = vmatpush1.msra.mxu0 0.0
    %47 = vmatprep.subr.mxu0 0.0
    %48 = vmatpush1.msra.mxu0 0.0
    %49 = vmatprep.subr.mxu0 0.0
    %50 = vmatpush1.msra.mxu0 0.0
    %51 = vmatprep.subr.mxu0 0.0
    %52 = vmatpush1.msra.mxu0 0.0
    %53 = vmatprep.subr.mxu0 0.0
    %54 = vmatpush1.msra.mxu0 0.0
    %55 = vmatprep.subr.mxu0 0.0
    %56 = vmatpush1.msra.mxu0 0.0
    %57 = vmatprep.subr.mxu0 0.0
    %58 = vmatpush1.msra.mxu0 0.0
    %59 = vmatprep.subr.mxu0 0.0
    %60 = vmatpush1.msra.mxu0 0.0
    %61 = vmatprep.subr.mxu0 0.0
    %62 = vmatpush1.msra.mxu0 0.0
    %63 = vmatprep.subr.mxu0 0.0
    %64 = vmatpush1.msra.mxu0 0.0
    %65 = vmatprep.subr.mxu0 0.0
    %66 = vmatpush1.msra.mxu0 0.0
    %67 = vmatprep.subr.mxu0 0.0
    %68 = vmatpush1.msra.mxu0 0.0
    %69 = vmatprep.subr.mxu0 0.0
    %70 = vmatpush1.msra.mxu0 0.0
    %71 = vmatprep.subr.mxu0 0.0
    %72 = vmatpush1.msra.mxu0 0.0
    %73 = vmatprep.subr.mxu0 0.0
    %74 = vmatpush1.msra.mxu0 0.0
    %75 = vmatprep.subr.mxu0 0.0
    %76 = vmatpush1.msra.mxu0 0.0
    %77 = vmatprep.subr.mxu0 0.0
    %78 = vmatpush1.msra.mxu0 0.0
    %79 = vmatprep.subr.mxu0 0.0
    %80 = vmatpush1.msra.mxu0 0.0
    %81 = vmatprep.subr.mxu0 0.0
    %82 = vmatpush1.msra.mxu0 0.0
    %83 = vmatprep.subr.mxu0 0.0
    %84 = vmatpush1.msra.mxu0 0.0
    %85 = vmatprep.subr.mxu0 0.0
    %86 = vmatpush1.msra.mxu0 0.0
    %87 = vmatprep.subr.mxu0 0.0
    %88 = vmatpush1.msra.mxu0 0.0
    %89 = vmatprep.subr.mxu0 0.0
    %90 = vmatpush1.msra.mxu0 0.0
    %91 = vmatprep.subr.mxu0 0.0
    %92 = vmatpush1.msra.mxu0 0.0
    %93 = vmatprep.subr.mxu0 0.0
    %94 = vmatpush1.msra.mxu0 0.0
    %95 = vmatprep.mubr.f32.mxu0 0.0
    %96 = vmatmul.mubr.f32.gmra.mrb[0].mxu0 %v29
    %v97 = vpop.f32.mrb[0].mxu0
    %v98 = vadd.f32 0.0, %v97
    %v99 = vpop.f32.mrb[0].mxu0
    %100 = vdwg.mxu0
    %v101 = vadd.f32 %v21, %v98
    %vm102 = vcmask 130048
    %103 = vst.msk [vmem:[#allocation2] sm:$0xff] %vm102, %v101
    // Predicated region
    $region18: #{linear_tanh.1} parent=1 // pred_check
      %p104 = pneg %p15
    $region19: #{linear_tanh.1} parent=1 // pred_check_branch
      %106 = sbr.rel (%p104) target = $region21
    $region20: #{linear_tanh.1} parent=1 // pred_region
      %v107 = vld [vmem:[#allocation2] sm:$0xff]
      %v108 = vld [vmem:[%s2] sm:$0x1]
      %v110 = vlaneseq
      %v111 = vshrl.u32 %v110, 7
      %v112 = vsub.s32 0, %v111
      %v113 = vrot.slane %v108, %v112
      %v115 = vadd.f32 %v107, %v113
      %v116 = vtanh.pop %v115
      %117 = vst.msk [vmem:[#allocation2] sm:$0xff] %vm102, %v116
    $region21: #{linear_tanh.1} parent=1 // pred_fallthru
      _
    // Predicated region
    $region22: #{linear_tanh.1} parent=1 // pred_check
      _
    $region23: #{linear_tanh.1} parent=1 // pred_check_branch
      %119 = sbr.rel (0) target = $region25
    $region24: #{linear_tanh.1} parent=1 // pred_region
      %s121 = ssub.s32 128, 128
      %122 = vsyncadd [#allocation3], %s121
      %s124 = sshll.u32 [#allocation2], 4
      %s125 = int_to_ptr.vmem [resolvable:$true] %s124
      %127 = dma.vmem_to_hbm [thread:$0]  %s125, 128, %s3, [#allocation3]
    $region25: #{linear_tanh.1} parent=1 // pred_fallthru
      _
    // Predicated region
    $region26: #{linear_tanh.1} parent=1 // pred_check
      _
    $region27: #{linear_tanh.1} parent=1 // pred_check_branch
      %129 = sbr.rel (0) target = $region29
    $region28: #{linear_tanh.1} parent=1 // pred_region
      %130 = dma.done [#allocation3], 128
    $region29: #{linear_tanh.1} parent=1 // pred_fallthru
      _
    %131 = vsyncpa [#allocation3], 1

</llo_original>
